<compile_context>
chip_gen: v7x
topology: tpu7x:2x2x1
jax: 0.10.0
libtpu: 0.0.40
codegen_flags: <defaults>
</compile_context>

<pallas_src>
import functools

import jax
import jax.numpy as jnp
from jax.experimental import pallas as pl
from jax.experimental.pallas import tpu as pltpu


def _round_up(x, m):
    return ((x + m - 1) // m) * m


def _vmem_capacity_bytes():
    """Physical VMEM per TensorCore; conservative (v7x, 64 MiB) fallback if unqueryable."""
    try:
        info = pltpu.get_tpu_info()
        cap = getattr(info, "vmem_capacity_bytes", None)
        if cap:
            return int(cap)
    except Exception:  # narrow: hardware query only, never wraps the kernel itself
        pass
    return 64 << 20


def _convblock_kernel(body_ref, halo_ref, w_ref, bias_ref, o_ref, *, fold_kw, approx_act):
    """One (batch, row-tile) grid step.

    body_ref : (1, TILE_H, Wp, Cin_p)   rows [t*TILE_H, (t+1)*TILE_H) of the padded image
    halo_ref : (1, KH-1, Wp, Cin_p)     the KH-1 rows just below the body block
    w_ref    : (KH, KW*Cin_p, Cout_p)   BN-scale-folded weights        (fold_kw=True)
               (KH, KW, Cin_p, Cout_p)                                  (fold_kw=False)
    bias_ref : (1, Cout_p)              folded BN bias (f32)
    o_ref    : (1, TILE_H*Wout_p, Cout_p)

    All data staging stays in the compute dtype (e.g. bf16); only the MXU accumulator
    and the SiLU epilogue run in f32.
    """
    tile_h = body_ref.shape[1]
    wp = body_ref.shape[2]
    cin_p = body_ref.shape[3]
    kh_size = halo_ref.shape[1] + 1
    if fold_kw:
        k_fold = w_ref.shape[1]
        kw_size = k_fold // cin_p
    else:
        kw_size = w_ref.shape[1]
    wout = wp - kw_size + 1
    m = tile_h * wout

    # Rows for this tile (+ halo), already in the compute dtype: no up/down casts.
    x_full = jnp.concatenate([body_ref[0], halo_ref[0]], axis=0)

    bias = bias_ref[...]  # (1, Cout_p) f32, folded into the accumulator init.

    acc = None
    if fold_kw:
        # kw alignment once per tile (KW shifted slices), then KH matmuls with
        # K = KW*Cin_p; per-kh offsets are cheap major-axis slices.
        xc = jnp.concatenate(
            [x_full[:, kw:kw + wout, :] for kw in range(kw_size)], axis=-1)
        for kh in range(kh_size):
            patch = xc[kh:kh + tile_h].reshape(m, k_fold)
            contrib = jnp.dot(patch, w_ref[kh], preferred_element_type=jnp.float32)
            acc = contrib + bias if acc is None else acc + contrib
    else:
        # Fallback path: kw kept as separate matmuls (K = Cin_p), shifts still hoisted.
        shifted = [x_full[:, kw:kw + wout, :] for kw in range(kw_size)]
        for kh in range(kh_size):
            for kw in range(kw_size):
                patch = shifted[kw][kh:kh + tile_h].reshape(m, cin_p)
                contrib = jnp.dot(patch, w_ref[kh, kw],
                                  preferred_element_type=jnp.float32)
                acc = contrib + bias if acc is None else acc + contrib

    # SiLU epilogue: sigmoid = 1/(1+exp(-y)); approx path keeps the reciprocal on EUP.
    if approx_act:
        sig = pl.reciprocal(1.0 + jnp.exp(-acc), approx=True)
    else:
        sig = 1.0 / (1.0 + jnp.exp(-acc))
    o_ref[0] = (acc * sig).astype(o_ref.dtype)


def _vmem_bytes(tile_h, halo, wp, wout, cin_p, cout_p, kh, kw,
                cd_bytes, out_bytes, const_bufs):
    """Estimated per-step VMEM footprint (pipeline buffers + in-kernel temporaries)."""
    k_fold = kw * cin_p
    m = tile_h * wout
    in_blk = (tile_h + halo) * wp * cin_p * cd_bytes         # body + halo blocks
    out_blk = m * cout_p * out_bytes
    consts = kh * k_fold * cout_p * cd_bytes + cout_p * 4    # weights + bias
    interm = ((tile_h + halo) * wp * cin_p * cd_bytes        # x_full (compute dtype)
              + (tile_h + halo) * wout * k_fold * cd_bytes   # xc
              + 2 * m * k_fold * cd_bytes                    # live patches
              + 3 * m * cout_p * 4)                          # f32 acc + epilogue temps
    # body/halo/out are double-buffered by the pipeline; weights/bias per const_bufs.
    return 2 * (in_blk + out_blk) + const_bufs * consts + interm


def _pick_tile_h(hout, halo, wp, wout, cin_p, cout_p, kh, kw,
                 cd_bytes, out_bytes, const_bufs, budget):
    step = 8
    while step % halo:
        step += 8
    cap = min(max(step, _round_up(hout, step)), 1024)
    fits = []
    t = step
    while t <= cap:
        if _vmem_bytes(t, halo, wp, wout, cin_p, cout_p, kh, kw,
                       cd_bytes, out_bytes, const_bufs) <= budget:
            fits.append(t)
        t += step
    if not fits:
        return step
    # Prefer the largest tile that divides Hout: no over-computed rows and the
    # post-kernel row slice becomes a no-op.
    divisors = [t for t in fits if hout % t == 0]
    return max(divisors) if divisors else max(fits)


def conv_block_nhwc(x, w, gamma, beta, running_mean, running_var, *,
                    stride=1, padding=1, eps=1e-5, compute_dtype=jnp.bfloat16,
                    tile_h=None, approx_act=True, fold_kw=True,
                    single_buffer_consts=True):
    """ConvBlock forward on NHWC input. x: (N, H, W, Cin), w: (KH, KW, Cin, Cout).

    Conv2d(3x3, s1, p1, bias=False) + BatchNorm2d (inference / running stats, folded
    into the weights) + SiLU, returned as (N, Hout, Wout, Cout) in x.dtype.
    compute_dtype defaults to bfloat16 (f32 MXU accumulation); pass jnp.float32 and
    approx_act=False for bit-tighter numerics.
    """
    # TODO(synk): use_bn=False / use_act=False module variants (plain conv bias /
    # identity epilogue) are not wired up; this implements the default ConvBlock.
    assert stride == 1, "this kernel implements the default stride=1 ConvBlock"
    N, H, W, Cin = x.shape
    KH, KW, wc, Cout = w.shape
    assert wc == Cin
    assert KH >= 2, "TODO(synk): KH == 1 would need a no-halo code path"

    out_dtype = x.dtype
    cd = jnp.dtype(compute_dtype) if compute_dtype is not None else jnp.dtype(jnp.bfloat16)
    cd_bytes = cd.itemsize
    out_bytes = jnp.dtype(out_dtype).itemsize

    Hout = H + 2 * padding - KH + 1
    Wout = W + 2 * padding - KW + 1
    assert Hout >= 1 and Wout >= 1
    halo = KH - 1

    # ---- fold BatchNorm (eval / running stats) into the conv weights / bias ---------
    # conv has no bias, so scale*(sum w*x) == sum (scale*w)*x exactly; only the folded
    # bias add stays in the kernel (fused into the accumulator init).
    # TODO(synk): training-mode BN (batch statistics) would need a separate reduction.
    inv_std = 1.0 / jnp.sqrt(running_var.astype(jnp.float32) + eps)
    scale = gamma.astype(jnp.float32) * inv_std
    bias = beta.astype(jnp.float32) - running_mean.astype(jnp.float32) * scale
    w_f = w.astype(jnp.float32) * scale[None, None, None, :]

    # ---- padding: Cout -> x128 (lane-dense stores), Cin -> x8, Wout -> sublane tile
    # so the (tile_h, wout) -> m reshape never relayouts. ------------------------------
    # TODO(synk): space-to-depth for small first-layer Cin to fill the MXU K dimension.
    Cin_p = _round_up(Cin, 8)
    Cout_p = _round_up(Cout, 128)
    sub = 8 * max(4 // cd_bytes, 4 // out_bytes, 1)   # sublane tile: f32 -> 8, bf16 -> 16
    Wout_p = _round_up(Wout, sub)
    Wp = Wout_p + KW - 1

    const_bufs = 1 if (single_buffer_consts and hasattr(pl, "Buffered")) else 2
    vmem_cap = _vmem_capacity_bytes()
    # Bigger working-set budget where VMEM is plentiful (v5e/v6e: 128 MiB), tighter on
    # v7x (64 MiB).
    budget = (28 << 20) if vmem_cap >= (100 << 20) else (14 << 20)

    if tile_h is None:
        tile_h = _pick_tile_h(Hout, halo, Wp, Wout_p, Cin_p, Cout_p, KH, KW,
                              cd_bytes, out_bytes, const_bufs, budget)
    assert tile_h % 8 == 0 and tile_h % halo == 0

    T = -(-Hout // tile_h)            # number of row tiles
    Hout_pad = T * tile_h
    Hp = Hout_pad + halo              # padded-image rows the kernel reads
    pad_bot = Hp - H - padding        # >= padding
    pad_right = Wp - W - padding      # >= padding

    # Single HBM pass: zero-pad + cast to the compute dtype (fused by XLA).
    # TODO(synk): fold the H/W zero-padding into the kernel (manual DMA + border memset)
    # to remove this extra activation read+write entirely.
    xp = jnp.pad(x.astype(cd),
                 ((0, 0), (padding, pad_bot), (padding, pad_right), (0, Cin_p - Cin)))
    w_p = jnp.pad(w_f, ((0, 0), (0, 0), (0, Cin_p - Cin), (0, Cout_p - Cout))).astype(cd)
    bias_p = jnp.pad(bias, (0, Cout_p - Cout)).reshape(1, Cout_p).astype(jnp.float32)

    if fold_kw:
        w_arg = w_p.reshape(KH, KW * Cin_p, Cout_p)
        w_shape = (KH, KW * Cin_p, Cout_p)
        w_map = lambda n, t: (0, 0, 0)
    else:
        w_arg = w_p
        w_shape = (KH, KW, Cin_p, Cout_p)
        w_map = lambda n, t: (0, 0, 0, 0)

    def _const_spec(shape, index_map):
        # Constant-index blocks: double-buffering them only wastes VMEM.
        if const_bufs == 1:
            return pl.BlockSpec(shape, index_map, pipeline_mode=pl.Buffered(1))
        return pl.BlockSpec(shape, index_map)

    hb = tile_h // halo               # halo offset in (KH-1)-row block units
    est = _vmem_bytes(tile_h, halo, Wp, Wout_p, Cin_p, Cout_p, KH, KW,
                      cd_bytes, out_bytes, const_bufs)
    # est already accounts for double-buffering; add headroom, never ask for all of VMEM.
    vmem_limit = int(min(max(est + (8 << 20), 16 << 20), (vmem_cap * 3) // 4))

    kernel = functools.partial(_convblock_kernel, fold_kw=fold_kw, approx_act=approx_act)
    grid_spec = pltpu.PrefetchScalarGridSpec(
        num_scalar_prefetch=0,
        grid=(N, T),
        in_specs=[
            # body rows of the padded image for this tile
            pl.BlockSpec((1, tile_h, Wp, Cin_p), lambda n, t: (n, t, 0, 0)),
            # (KH-1)-row halo just below the body (same array passed again)
            pl.BlockSpec((1, halo, Wp, Cin_p), lambda n, t: (n, (t + 1) * hb, 0, 0)),
            _const_spec(w_shape, w_map),
            _const_spec((1, Cout_p), lambda n, t: (0, 0)),
        ],
        out_specs=pl.BlockSpec((1, tile_h * Wout_p, Cout_p), lambda n, t: (n, t, 0)),
    )
    fn = pl.pallas_call(
        kernel,
        out_shape=jax.ShapeDtypeStruct((N, Hout_pad * Wout_p, Cout_p), out_dtype),
        grid_spec=grid_spec,
        compiler_params=pltpu.CompilerParams(
            dimension_semantics=("parallel", "parallel"),
            vmem_limit_bytes=vmem_limit,
        ),
    )
    out_flat = fn(xp, xp, w_arg, bias_p)

    # No-op slice whenever tile_h | Hout, Wout % sub == 0 and Cout % 128 == 0.
    out = out_flat.reshape(N, Hout_pad, Wout_p, Cout_p)[:, :Hout, :Wout, :Cout]
    return out


def conv_block(x_nchw, w, gamma, beta, running_mean, running_var, *,
               stride=1, padding=1, eps=1e-5, compute_dtype=jnp.bfloat16,
               tile_h=None, approx_act=True, fold_kw=True, single_buffer_consts=True):
    """ConvBlock forward, PyTorch NCHW convention: (N, Cin, H, W) -> (N, Cout, H, W).

    NOTE: the NCHW<->NHWC transposes here are interface glue; NHWC callers should use
    conv_block_nhwc() directly to avoid two extra HBM passes.
    """
    x = jnp.transpose(x_nchw, (0, 2, 3, 1))
    out = conv_block_nhwc(x, w, gamma, beta, running_mean, running_var,
                          stride=stride, padding=padding, eps=eps,
                          compute_dtype=compute_dtype, tile_h=tile_h,
                          approx_act=approx_act, fold_kw=fold_kw,
                          single_buffer_consts=single_buffer_consts)
    return jnp.transpose(out, (0, 3, 1, 2))


def _reference(x_nchw, w, gamma, beta, running_mean, running_var, *, padding=1, eps=1e-5):
    # Pure-JAX reference for sanity checking (inference-mode BN).
    w_oihw = jnp.transpose(w, (3, 2, 0, 1))  # (Cout, Cin, KH, KW)
    y = jax.lax.conv_general_dilated(
        x_nchw, w_oihw, window_strides=(1, 1),
        padding=((padding, padding), (padding, padding)),
        dimension_numbers=("NCHW", "OIHW", "NCHW"),
        precision=jax.lax.Precision.HIGHEST)
    inv_std = 1.0 / jnp.sqrt(running_var + eps)
    y = (y - running_mean[None, :, None, None]) * (gamma * inv_std)[None, :, None, None]
    y = y + beta[None, :, None, None]
    return y * jax.nn.sigmoid(y)


if __name__ == "__main__":
    key = jax.random.PRNGKey(0)
    N, Cin, H, W = 2, 4, 16, 16
    Cout, KH, KW = 8, 3, 3

    k_x, k_w, k_g, k_b, k_m, k_v = jax.random.split(key, 6)
    x = jax.random.normal(k_x, (N, Cin, H, W), jnp.float32)

    # Conv2d default init: kaiming_uniform(a=sqrt(5)) => U(-1/sqrt(fan_in), 1/sqrt(fan_in))
    fan_in = Cin * KH * KW
    bound = 1.0 / (fan_in ** 0.5)
    w = jax.random.uniform(k_w, (KH, KW, Cin, Cout), jnp.float32, -bound, bound)

    # Non-trivial BatchNorm parameters / running stats so the BN->weight fold is exercised.
    gamma = jax.random.uniform(k_g, (Cout,), jnp.float32, 0.5, 1.5)
    beta = 0.1 * jax.random.normal(k_b, (Cout,), jnp.float32)
    running_mean = 0.1 * jax.random.normal(k_m, (Cout,), jnp.float32)
    running_var = jax.random.uniform(k_v, (Cout,), jnp.float32, 0.5, 1.5)

    ref = _reference(x, w, gamma, beta, running_mean, running_var)

    # 1) f32 compute, exact sigmoid, tile_h=8: exercises the (batch, row-tile) grid with
    #    halo stitching (2 row tiles per image).
    out = conv_block(x, w, gamma, beta, running_mean, running_var,
                     compute_dtype=jnp.float32, tile_h=8, approx_act=False)
    out = jax.block_until_ready(out)
    assert out.shape == (N, Cout, H, W), out.shape
    err = float(jnp.abs(out - ref).max())
    assert jnp.allclose(out, ref, atol=2e-4, rtol=2e-4), err

    # 2) Default inference path: bf16 MXU operands (f32 accumulation), approx SiLU,
    #    auto-picked row tile.
    out_bf16 = conv_block(x, w, gamma, beta, running_mean, running_var)
    out_bf16 = jax.block_until_ready(out_bf16)
    assert out_bf16.shape == (N, Cout, H, W), out_bf16.shape
    err16 = float(jnp.abs(out_bf16 - ref).max())
    assert jnp.allclose(out_bf16, ref, atol=5e-2, rtol=5e-2), err16

    # 3) Ragged spatial shape (Hout, Wout not multiples of 8) to exercise the Wout /
    #    Hout padding + slice-off paths.
    x3 = jax.random.normal(jax.random.PRNGKey(1), (N, Cin, 11, 13), jnp.float32)
    ref3 = _reference(x3, w, gamma, beta, running_mean, running_var)
    out3 = conv_block(x3, w, gamma, beta, running_mean, running_var,
                      compute_dtype=jnp.float32, approx_act=False)
    out3 = jax.block_until_ready(out3)
    assert out3.shape == ref3.shape, (out3.shape, ref3.shape)
    err3 = float(jnp.abs(out3 - ref3).max())
    assert jnp.allclose(out3, ref3, atol=2e-4, rtol=2e-4), err3

    print("KERNEL_OK")
</pallas_src>

<mosaic_0001>
module attributes {stable_mosaic.version = 11 : i64} {
  func.func @_convblock_kernel(%arg0: i32, %arg1: i32, %arg2: memref<1x8x18x8xf32, #tpu.memory_space<vmem>>, %arg3: memref<1x2x18x8xf32, #tpu.memory_space<vmem>>, %arg4: memref<3x24x128xf32, #tpu.memory_space<vmem>>, %arg5: memref<1x128xf32, #tpu.memory_space<vmem>>, %arg6: memref<1x128x128xf32, #tpu.memory_space<vmem>>) attributes {dimension_semantics = [#tpu.dimension_semantics<parallel>, #tpu.dimension_semantics<parallel>], iteration_bounds = array<i64: 2, 2>, scalar_prefetch = 0 : i64, scratch_operands = 0 : i64, tpu.core_type = #tpu.core_type<tc>, window_params = [{transform_indices = @transform_0, window_bounds = array<i64: 1, 8, 18, 8>}, {transform_indices = @transform_1, window_bounds = array<i64: 1, 2, 18, 8>}, {pipeline_mode = #tpu.pipeline_mode<synchronous>, transform_indices = @transform_2, window_bounds = array<i64: 3, 24, 128>}, {pipeline_mode = #tpu.pipeline_mode<synchronous>, transform_indices = @transform_3, window_bounds = array<i64: 1, 128>}, {transform_indices = @transform_4, window_bounds = array<i64: 1, 128, 128>}]} {
    %c0 = arith.constant 0 : index
    %c0_0 = arith.constant 0 : index
    %c0_1 = arith.constant 0 : index
    %c0_2 = arith.constant 0 : index
    %0 = vector.load %arg2[%c0, %c0_0, %c0_1, %c0_2] : memref<1x8x18x8xf32, #tpu.memory_space<vmem>>, vector<1x8x18x8xf32>
    %1 = vector.shape_cast %0 : vector<1x8x18x8xf32> to vector<8x18x8xf32>
    %c0_3 = arith.constant 0 : index
    %c0_4 = arith.constant 0 : index
    %c0_5 = arith.constant 0 : index
    %c0_6 = arith.constant 0 : index
    %2 = vector.load %arg3[%c0_3, %c0_4, %c0_5, %c0_6] : memref<1x2x18x8xf32, #tpu.memory_space<vmem>>, vector<1x2x18x8xf32>
    %3 = vector.shape_cast %2 : vector<1x2x18x8xf32> to vector<2x18x8xf32>
    %4 = tpu.concatenate %1, %3 in 0 : vector<8x18x8xf32>, vector<2x18x8xf32> -> vector<10x18x8xf32>
    %c0_7 = arith.constant 0 : index
    %c0_8 = arith.constant 0 : index
    %5 = vector.load %arg5[%c0_7, %c0_8] : memref<1x128xf32, #tpu.memory_space<vmem>>, vector<1x128xf32>
    %6 = vector.extract_strided_slice %4 {offsets = [0, 0, 0], sizes = [10, 16, 8], strides = [1, 1, 1]} : vector<10x18x8xf32> to vector<10x16x8xf32>
    %7 = vector.extract_strided_slice %4 {offsets = [0, 1, 0], sizes = [10, 16, 8], strides = [1, 1, 1]} : vector<10x18x8xf32> to vector<10x16x8xf32>
    %8 = vector.extract_strided_slice %4 {offsets = [0, 2, 0], sizes = [10, 16, 8], strides = [1, 1, 1]} : vector<10x18x8xf32> to vector<10x16x8xf32>
    %9 = tpu.concatenate %6, %7, %8 in 2 : vector<10x16x8xf32>, vector<10x16x8xf32>, vector<10x16x8xf32> -> vector<10x16x24xf32>
    %10 = vector.extract_strided_slice %9 {offsets = [0, 0, 0], sizes = [8, 16, 24], strides = [1, 1, 1]} : vector<10x16x24xf32> to vector<8x16x24xf32>
    %11 = vector.shape_cast %10 : vector<8x16x24xf32> to vector<128x24xf32>
    %c0_9 = arith.constant 0 : index
    %c0_10 = arith.constant 0 : index
    %c0_11 = arith.constant 0 : index
    %12 = vector.load %arg4[%c0_9, %c0_10, %c0_11] : memref<3x24x128xf32, #tpu.memory_space<vmem>>, vector<1x24x128xf32>
    %13 = vector.shape_cast %12 : vector<1x24x128xf32> to vector<24x128xf32>
    %cst = arith.constant dense<0.000000e+00> : vector<128x128xf32>
    %14 = tpu.matmul %11, %13, %cst {dimension_numbers = #tpu.dot_dimension_numbers<[1], [0], [0], [1], [0, 0, 1, 1], [], []>} : vector<128x24xf32>, vector<24x128xf32>, vector<128x128xf32> -> vector<128x128xf32>
    %15 = vector.broadcast %5 : vector<1x128xf32> to vector<128x128xf32>
    %16 = arith.addf %14, %15 : vector<128x128xf32>
    %17 = vector.extract_strided_slice %9 {offsets = [1, 0, 0], sizes = [8, 16, 24], strides = [1, 1, 1]} : vector<10x16x24xf32> to vector<8x16x24xf32>
    %18 = vector.shape_cast %17 : vector<8x16x24xf32> to vector<128x24xf32>
    %c1 = arith.constant 1 : index
    %c0_12 = arith.constant 0 : index
    %c0_13 = arith.constant 0 : index
    %19 = vector.load %arg4[%c1, %c0_12, %c0_13] : memref<3x24x128xf32, #tpu.memory_space<vmem>>, vector<1x24x128xf32>
    %20 = vector.shape_cast %19 : vector<1x24x128xf32> to vector<24x128xf32>
    %cst_14 = arith.constant dense<0.000000e+00> : vector<128x128xf32>
    %21 = tpu.matmul %18, %20, %cst_14 {dimension_numbers = #tpu.dot_dimension_numbers<[1], [0], [0], [1], [0, 0, 1, 1], [], []>} : vector<128x24xf32>, vector<24x128xf32>, vector<128x128xf32> -> vector<128x128xf32>
    %22 = arith.addf %16, %21 : vector<128x128xf32>
    %23 = vector.extract_strided_slice %9 {offsets = [2, 0, 0], sizes = [8, 16, 24], strides = [1, 1, 1]} : vector<10x16x24xf32> to vector<8x16x24xf32>
    %24 = vector.shape_cast %23 : vector<8x16x24xf32> to vector<128x24xf32>
    %c2 = arith.constant 2 : index
    %c0_15 = arith.constant 0 : index
    %c0_16 = arith.constant 0 : index
    %25 = vector.load %arg4[%c2, %c0_15, %c0_16] : memref<3x24x128xf32, #tpu.memory_space<vmem>>, vector<1x24x128xf32>
    %26 = vector.shape_cast %25 : vector<1x24x128xf32> to vector<24x128xf32>
    %cst_17 = arith.constant dense<0.000000e+00> : vector<128x128xf32>
    %27 = tpu.matmul %24, %26, %cst_17 {dimension_numbers = #tpu.dot_dimension_numbers<[1], [0], [0], [1], [0, 0, 1, 1], [], []>} : vector<128x24xf32>, vector<24x128xf32>, vector<128x128xf32> -> vector<128x128xf32>
    %28 = arith.addf %22, %27 : vector<128x128xf32>
    %cst_18 = arith.constant 0.000000e+00 : f32
    %29 = vector.broadcast %cst_18 : f32 to vector<128x128xf32>
    %30 = arith.subf %29, %28 : vector<128x128xf32>
    %31 = math.exp %30 : vector<128x128xf32>
    %cst_19 = arith.constant 1.000000e+00 : f32
    %32 = vector.broadcast %cst_19 : f32 to vector<128x128xf32>
    %33 = arith.addf %32, %31 : vector<128x128xf32>
    %cst_20 = arith.constant 1.000000e+00 : f32
    %34 = vector.broadcast %cst_20 : f32 to vector<128x128xf32>
    %35 = arith.divf %34, %33 : vector<128x128xf32>
    %36 = arith.mulf %28, %35 : vector<128x128xf32>
    %c0_21 = arith.constant 0 : index
    %c0_22 = arith.constant 0 : index
    %c0_23 = arith.constant 0 : index
    %37 = vector.load %arg6[%c0_21, %c0_22, %c0_23] : memref<1x128x128xf32, #tpu.memory_space<vmem>>, vector<1x128x128xf32>
    %38 = vector.shape_cast %37 : vector<1x128x128xf32> to vector<128x128xf32>
    %39 = vector.shape_cast %36 : vector<128x128xf32> to vector<1x128x128xf32>
    tpu.vector_store %arg6[%c0_21, %c0_22, %c0_23], %39 {strides = array<i32>} : memref<1x128x128xf32, #tpu.memory_space<vmem>>, vector<1x128x128xf32>,
    return
  }
  func.func @transform_0(%arg0: i32, %arg1: i32) -> (i32, i32, i32, i32) {
    %c0_i32 = arith.constant 0 : i32
    %c0_i32_0 = arith.constant 0 : i32
    %c0_i32_1 = arith.constant 0 : i32
    return %arg0, %arg1, %c0_i32, %c0_i32_0 : i32, i32, i32, i32
  }
  func.func @transform_1(%arg0: i32, %arg1: i32) -> (i32, i32, i32, i32) {
    %c1_i32 = arith.constant 1 : i32
    %0 = arith.addi %arg1, %c1_i32 : i32
    %c4_i32 = arith.constant 4 : i32
    %1 = arith.muli %0, %c4_i32 : i32
    %c0_i32 = arith.constant 0 : i32
    %c0_i32_0 = arith.constant 0 : i32
    %c0_i32_1 = arith.constant 0 : i32
    return %arg0, %1, %c0_i32, %c0_i32_0 : i32, i32, i32, i32
  }
  func.func @transform_2(%arg0: i32, %arg1: i32) -> (i32, i32, i32) {
    %c0_i32 = arith.constant 0 : i32
    %c0_i32_0 = arith.constant 0 : i32
    %c0_i32_1 = arith.constant 0 : i32
    %c0_i32_2 = arith.constant 0 : i32
    return %c0_i32, %c0_i32_0, %c0_i32_1 : i32, i32, i32
  }
  func.func @transform_3(%arg0: i32, %arg1: i32) -> (i32, i32) {
    %c0_i32 = arith.constant 0 : i32
    %c0_i32_0 = arith.constant 0 : i32
    %c0_i32_1 = arith.constant 0 : i32
    return %c0_i32, %c0_i32_0 : i32, i32
  }
  func.func @transform_4(%arg0: i32, %arg1: i32) -> (i32, i32, i32) {
    %c0_i32 = arith.constant 0 : i32
    %c0_i32_0 = arith.constant 0 : i32
    return %arg0, %arg1, %c0_i32 : i32, i32, i32
  }
}

</mosaic_0001>

<llo_original>
// kernel: tpu_custom_call.1
$region0: #{tpu_custom_call.1}
  #allocation0 [shape = 'u32[]', space=smem, size = 0x4, offset = 0x4, fixed_abs, tag = 'smem constant byte address 0x4 - core index']
  #allocation1 [shape = 'u32[144,128]{1,0:T(1,128)}', space=vmem, size = 0x12000, scoped, tag = 'internal scratch']
  %s0 = inlined_call_operand.vmem [shape: f32[2,18,18,8], index: 0, kind: input, shape index: {}]
  %s1 = inlined_call_operand.vmem [shape: f32[2,18,18,8], index: 1, kind: input, shape index: {}]
  %s2 = inlined_call_operand.vmem [shape: f32[3,24,128], index: 2, kind: input, shape index: {}]
  %s3 = inlined_call_operand.vmem [shape: f32[1,128], index: 3, kind: input, shape index: {}]
  %s4 = inlined_call_operand.hbm [shape: f32[2,256,128], index: 4, kind: output, shape index: {}]
  %s5 = sld [smem:[#allocation0]]
  $region49: #{tpu_custom_call.1} parent=0
    _
  %s7 = ssub.s32 1, %s5
  %s8 = scalar_select 0, %s7, %s5
  $region1: #{tpu_custom_call.1} parent=0
    #allocation2 [shape = 'u8[131072]{0}', space=vmem, size = 0x20000, scoped, tag = 'output window, operand 0']
    #allocation3 [shape = 's32[2]{0}', space=sflag, size = 0x8, scoped, tag = 'scoped memory for tpu_custom_call.1']
    %9 = vsyncpa [#allocation3], 0
    %s10 = scalar_lea.sflag [#allocation3], 1
    %11 = vsyncpa %s10, 0
    loop: start=0, step=1, limit=6
    $region2: #{tpu_custom_call.1} parent=1 // loop_pre_header
      _
    $region3: #{tpu_custom_call.1} parent=1 // loop_header
      %s13 = sphi 0, %s17
      %p14 = scmp.ge.s32.totalorder %s13, 6
      %s20 = sphi 0, %s32
      %s21 = sphi 0, %s28
      %s22 = sphi 0, %s20
      %s23 = sphi 0, %s21
      %s24 = sphi 0, %s22
      %s25 = sphi 0, %s23
      %s37 = sphi 0, %s39
      %s40 = sphi 0, %s37
      %s41 = sphi 0, %s40
      %s57 = sphi 0, %s41
      %s69 = sphi 0, %s71
      %s72 = sphi 0, %s69
      %s73 = sphi 0, %s72
      %s89 = sphi 0, %s73
      %s93 = sphi 0, %s93
      %s95 = sphi 0, %s93
      %s96 = sphi 0, %s95
      %s110 = sphi 0, %s96
      %s114 = sphi 0, %s114
      %s116 = sphi 0, %s114
      %s117 = sphi 0, %s116
      %s131 = sphi 0, %s117
      %s139 = sphi 0, %s141
      %s142 = sphi 0, %s139
      %s143 = sphi 0, %s142
      %s159 = sphi 0, %s143
    $region4: #{tpu_custom_call.1} parent=1 // loop_header_branch
      %16 = sbr.rel (%p14) target = $region8
    $region5: #{tpu_custom_call.1} parent=1 // loop_body
      %s18 = ssub.s32 %s13, 1
      %s19 = ssub.s32 %s13, 2
      %s26 = sadd.s32 1, %s21
      %p27 = scmp.ge.s32.totalorder %s26, 2
      %s28 = scalar_select %p27, 0, %s26
      %s29 = sadd.s32 1, %s20
      %s30 = scalar_select %p27, %s29, %s20
      %p31 = scmp.ge.s32.totalorder %s30, 2
      %s32 = scalar_select %p31, 0, %s30
      %s33 = ssub.s32 %s20, %s32
      %s34 = ssub.s32 %s21, %s28
      %s35 = sor.u32 %s33, %s34
      %p36 = scmp.eq.s32.totalorder %s35, 0
      %s38 = sadd.s32 %s37, 1
      %s39 = scalar_select %p36, %s37, %s38
      %p42 = pneg %p36
      %p43 = scmp.eq.s32.totalorder %s13, 3
      %p44 = por %p42, %p43
      %p45 = scmp.ne.s32.totalorder %s37, %s40
      %p46 = scmp.eq.s32.totalorder %s13, 0
      %p47 = por %p45, %p46
      %p48 = scmp.ne.s32.totalorder %s37, %s40
      %p49 = scmp.eq.s32.totalorder %s18, 3
      %p50 = por %p48, %p49
      %p51 = scmp.ne.s32.totalorder %s40, %s41
      %p52 = scmp.eq.s32.totalorder %s18, 0
      %p53 = por %p51, %p52
      %p54 = scmp.ne.s32.totalorder %s40, %s41
      %p55 = scmp.eq.s32.totalorder %s19, 3
      %p56 = por %p54, %p55
      %p58 = scmp.ne.s32.totalorder %s41, %s57
      %p59 = scmp.eq.s32.totalorder %s19, 0
      %p60 = por %p58, %p59
      %s61 = sadd.s32 %s21, 1
      %s62 = smul.u32 %s61, 4
      %s63 = sadd.s32 %s28, 1
      %s64 = smul.u32 %s63, 4
      %s65 = ssub.s32 %s20, %s32
      %s66 = ssub.s32 %s62, %s64
      %s67 = sor.u32 %s65, %s66
      %p68 = scmp.eq.s32.totalorder %s67, 0
      %s70 = sadd.s32 %s69, 1
      %s71 = scalar_select %p68, %s69, %s70
      %p74 = pneg %p68
      %p75 = scmp.eq.s32.totalorder %s13, 3
      %p76 = por %p74, %p75
      %p77 = scmp.ne.s32.totalorder %s69, %s72
      %p78 = scmp.eq.s32.totalorder %s13, 0
      %p79 = por %p77, %p78
      %p80 = scmp.ne.s32.totalorder %s69, %s72
      %p81 = scmp.eq.s32.totalorder %s18, 3
      %p82 = por %p80, %p81
      %p83 = scmp.ne.s32.totalorder %s72, %s73
      %p84 = scmp.eq.s32.totalorder %s18, 0
      %p85 = por %p83, %p84
      %p86 = scmp.ne.s32.totalorder %s72, %s73
      %p87 = scmp.eq.s32.totalorder %s19, 3
      %p88 = por %p86, %p87
      %p90 = scmp.ne.s32.totalorder %s73, %s89
      %p91 = scmp.eq.s32.totalorder %s19, 0
      %p92 = por %p90, %p91
      %s94 = sadd.s32 %s93, 1
      %p97 = scmp.eq.s32.totalorder %s13, 3
      %p98 = scmp.ne.s32.totalorder %s93, %s95
      %p99 = scmp.eq.s32.totalorder %s13, 0
      %p100 = por %p98, %p99
      %p101 = scmp.ne.s32.totalorder %s93, %s95
      %p102 = scmp.eq.s32.totalorder %s18, 3
      %p103 = por %p101, %p102
      %p104 = scmp.ne.s32.totalorder %s95, %s96
      %p105 = scmp.eq.s32.totalorder %s18, 0
      %p106 = por %p104, %p105
      %p107 = scmp.ne.s32.totalorder %s95, %s96
      %p108 = scmp.eq.s32.totalorder %s19, 3
      %p109 = por %p107, %p108
      %p111 = scmp.ne.s32.totalorder %s96, %s110
      %p112 = scmp.eq.s32.totalorder %s19, 0
      %p113 = por %p111, %p112
      %s115 = sadd.s32 %s114, 1
      %p118 = scmp.eq.s32.totalorder %s13, 3
      %p119 = scmp.ne.s32.totalorder %s114, %s116
      %p120 = scmp.eq.s32.totalorder %s13, 0
      %p121 = por %p119, %p120
      %p122 = scmp.ne.s32.totalorder %s114, %s116
      %p123 = scmp.eq.s32.totalorder %s18, 3
      %p124 = por %p122, %p123
      %p125 = scmp.ne.s32.totalorder %s116, %s117
      %p126 = scmp.eq.s32.totalorder %s18, 0
      %p127 = por %p125, %p126
      %p128 = scmp.ne.s32.totalorder %s116, %s117
      %p129 = scmp.eq.s32.totalorder %s19, 3
      %p130 = por %p128, %p129
      %p132 = scmp.ne.s32.totalorder %s117, %s131
      %p133 = scmp.eq.s32.totalorder %s19, 0
      %p134 = por %p132, %p133
      %s135 = ssub.s32 %s20, %s32
      %s136 = ssub.s32 %s21, %s28
      %s137 = sor.u32 %s135, %s136
      %p138 = scmp.eq.s32.totalorder %s137, 0
      %s140 = sadd.s32 %s139, 1
      %s141 = scalar_select %p138, %s139, %s140
      %p144 = pneg %p138
      %p145 = scmp.eq.s32.totalorder %s13, 3
      %p146 = por %p144, %p145
      %p147 = scmp.ne.s32.totalorder %s139, %s142
      %p148 = scmp.eq.s32.totalorder %s13, 0
      %p149 = por %p147, %p148
      %p150 = scmp.ne.s32.totalorder %s139, %s142
      %p151 = scmp.eq.s32.totalorder %s18, 3
      %p152 = por %p150, %p151
      %p153 = scmp.ne.s32.totalorder %s142, %s143
      %p154 = scmp.eq.s32.totalorder %s18, 0
      %p155 = por %p153, %p154
      %p156 = scmp.ne.s32.totalorder %s142, %s143
      %p157 = scmp.eq.s32.totalorder %s19, 3
      %p158 = por %p156, %p157
      %p160 = scmp.ne.s32.totalorder %s143, %s159
      %p161 = scmp.eq.s32.totalorder %s19, 0
      %p162 = por %p160, %p161
      %p163 = scmp.le.s32.totalorder 1, %s13
      %p164 = scmp.lt.s32.totalorder %s13, 5
      %p165 = pnand %p163, %p164
      %p166 = pneg %p165
      // Predicated region
      $region9: #{tpu_custom_call.1} parent=5 // pred_check
        _
      $region10: #{tpu_custom_call.1} parent=5 // pred_check_branch
        %168 = sbr.rel (%p165) target = $region12
      $region11: #{tpu_custom_call.1} parent=5 // pred_region
        %s169 = ssub.s32 %s13, 1
        // Predicated region
        $region13: #{tpu_custom_call.1} parent=11 // pred_check
          %p170 = pneg %p106
        $region14: #{tpu_custom_call.1} parent=11 // pred_check_branch
          %172 = sbr.rel (%p170) target = $region16
        $region15: #{tpu_custom_call.1} parent=11 // pred_region
          _
        $region16: #{tpu_custom_call.1} parent=11 // pred_fallthru
          _
        // Predicated region
        $region17: #{tpu_custom_call.1} parent=11 // pred_check
          %p173 = pneg %p127
        $region18: #{tpu_custom_call.1} parent=11 // pred_check_branch
          %175 = sbr.rel (%p173) target = $region20
        $region19: #{tpu_custom_call.1} parent=11 // pred_region
          _
        $region20: #{tpu_custom_call.1} parent=11 // pred_fallthru
          _
      $region12: #{tpu_custom_call.1} parent=5 // pred_fallthru
        _
      %p176 = scmp.lt.s32.totalorder %s13, 4
      // Predicated region
      $region21: #{tpu_custom_call.1} parent=5 // pred_check
        %p177 = pneg %p176
      $region22: #{tpu_custom_call.1} parent=5 // pred_check_branch
        %179 = sbr.rel (%p177) target = $region24
      $region23: #{tpu_custom_call.1} parent=5 // pred_region
        // Predicated region
        $region25: #{tpu_custom_call.1} parent=23 // pred_check
          %p180 = pneg %p47
        $region26: #{tpu_custom_call.1} parent=23 // pred_check_branch
          %182 = sbr.rel (%p180) target = $region28
        $region27: #{tpu_custom_call.1} parent=23 // pred_region
          %s183 = smul.u32 8, %s21
          %s184 = ssub.s32 18, %s183
          %p185 = scmp.lt.s32.totalorder %s184, 8
          %s186 = scalar_select %p185, %s184, 8
          %s187 = smul.u32 128, %s186
          %s188 = smul.u32 %s187, 3
          %p189 = scmp.lt.s32.totalorder %s20, 1
          %s190 = scalar_select %p189, %s20, 1
          %p191 = scmp.lt.s32.totalorder %s183, 17
          %s192 = scalar_select %p191, %s183, 17
          %s193 = smul.addr %s192, 3
          %s194 = smul.addr %s190, 54
          %s195 = sadd.s32 %s193, %s194
          %s196 = smul.addr %s195, 8
          %s197 = scalar_lea.vmem %s0, %s196
          %s198 = smul.u32 8, %s21
          %s199 = ssub.s32 18, %s198
          %p200 = scmp.lt.s32.totalorder %s199, 8
          %s201 = scalar_select %p200, %s199, 8
          %s202 = smul.u32 128, %s201
          %s203 = smul.u32 %s202, 3
        $region28: #{tpu_custom_call.1} parent=23 // pred_fallthru
          _
        // Predicated region
        $region29: #{tpu_custom_call.1} parent=23 // pred_check
          %p204 = pneg %p79
        $region30: #{tpu_custom_call.1} parent=23 // pred_check_branch
          %206 = sbr.rel (%p204) target = $region32
        $region31: #{tpu_custom_call.1} parent=23 // pred_region
          %s207 = sadd.s32 %s21, 1
          %s208 = smul.u32 %s207, 4
          %s209 = smul.u32 2, %s208
          %p210 = scmp.lt.s32.totalorder %s20, 1
          %s211 = scalar_select %p210, %s20, 1
          %p212 = scmp.lt.s32.totalorder %s209, 17
          %s213 = scalar_select %p212, %s209, 17
          %s214 = smul.addr %s213, 3
          %s215 = smul.addr %s211, 54
          %s216 = sadd.s32 %s214, %s215
          %s217 = smul.addr %s216, 8
          %s218 = scalar_lea.vmem %s1, %s217
          %s219 = sadd.s32 %s21, 1
          %s220 = smul.u32 %s219, 4
          %s221 = smul.u32 2, %s220
        $region32: #{tpu_custom_call.1} parent=23 // pred_fallthru
          _
      $region24: #{tpu_custom_call.1} parent=5 // pred_fallthru
        _
      %p222 = scmp.le.s32.totalorder 1, %s13
      %p223 = scmp.lt.s32.totalorder %s13, 5
      %p224 = pnand %p222, %p223
      %p225 = pneg %p224
      // Predicated region
      $region33: #{tpu_custom_call.1} parent=5 // pred_check
        _
      $region34: #{tpu_custom_call.1} parent=5 // pred_check_branch
        %227 = sbr.rel (%p224) target = $region36
      $region35: #{tpu_custom_call.1} parent=5 // pred_region
        %s228 = ssub.s32 %s13, 1
        %s229 = smul.u32 8, %s23
        %s230 = ssub.s32 18, %s229
        %p231 = scmp.lt.s32.totalorder %s230, 8
        %s232 = scalar_select %p231, %s230, 8
        %s233 = smul.u32 128, %s232
        %s234 = smul.u32 %s233, 3
        %p235 = scmp.lt.s32.totalorder %s22, 1
        %s236 = scalar_select %p235, %s22, 1
        %p237 = scmp.lt.s32.totalorder %s229, 17
        %s238 = scalar_select %p237, %s229, 17
        %s239 = smul.addr %s238, 3
        %s240 = smul.addr %s236, 54
        %s241 = sadd.s32 %s239, %s240
        %s242 = smul.addr %s241, 8
        %s243 = scalar_lea.vmem %s0, %s242
        %p244 = pneg %p53
        %p245 = pneg %p50
        %s246 = sadd.s32 %s23, 1
        %s247 = smul.u32 %s246, 4
        %s248 = smul.u32 2, %s247
        %p249 = scmp.lt.s32.totalorder %s22, 1
        %s250 = scalar_select %p249, %s22, 1
        %p251 = scmp.lt.s32.totalorder %s248, 17
        %s252 = scalar_select %p251, %s248, 17
        %s253 = smul.addr %s252, 3
        %s254 = smul.addr %s250, 54
        %s255 = sadd.s32 %s253, %s254
        %s256 = smul.addr %s255, 8
        %s257 = scalar_lea.vmem %s1, %s256
        %p258 = pneg %p85
        %p259 = pneg %p82
        %p260 = pneg %p106
        %p261 = pneg %p103
        %p262 = pneg %p127
        %p263 = pneg %p124
        %p264 = pneg %p155
        %p265 = pneg %p152
        %s266 = sand.u32 %s142, 1
        %s267 = scalar_lea.sflag [#allocation3], %s266
        %s268 = sand.u32 %s142, 1
        %s269 = smul.addr %s268, 128
        %s270 = scalar_lea.vmem [#allocation2], %s269
        %s271 = smul.u32 8, %s23
        %s272 = ssub.s32 18, %s271
        %p273 = scmp.lt.s32.totalorder %s272, 8
        %s274 = scalar_select %p273, %s272, 8
        %s275 = smul.u32 128, %s274
        %s276 = smul.u32 %s275, 3
        %p277 = scmp.lt.s32.totalorder %s22, 1
        %s278 = scalar_select %p277, %s22, 1
        %p279 = scmp.lt.s32.totalorder %s271, 17
        %s280 = scalar_select %p279, %s271, 17
        %s281 = smul.addr %s280, 3
        %s282 = smul.addr %s278, 54
        %s283 = sadd.s32 %s281, %s282
        %s284 = smul.addr %s283, 8
        %s285 = scalar_lea.vmem %s0, %s284
        %s286 = smul.u32 8, %s23
        %s287 = ssub.s32 18, %s286
        %p288 = scmp.lt.s32.totalorder %s287, 8
        %s289 = scalar_select %p288, %s287, 8
        %s290 = smul.u32 128, %s289
        %s291 = smul.u32 %s290, 3
        %s292 = sadd.s32 %s23, 1
        %s293 = smul.u32 %s292, 4
        %s294 = smul.u32 2, %s293
        %p295 = scmp.lt.s32.totalorder %s22, 1
        %s296 = scalar_select %p295, %s22, 1
        %p297 = scmp.lt.s32.totalorder %s294, 17
        %s298 = scalar_select %p297, %s294, 17
        %s299 = smul.addr %s298, 3
        %s300 = smul.addr %s296, 54
        %s301 = sadd.s32 %s299, %s300
        %s302 = smul.addr %s301, 8
        %s303 = scalar_lea.vmem %s1, %s302
        %s304 = sadd.s32 %s23, 1
        %s305 = smul.u32 %s304, 4
        %s306 = smul.u32 2, %s305
        %s307 = smul.u32 16, %s23
        %v308 = vld [vmem:[%s285] sm:$0xff]
        %v309 = vld [vmem:[%s285 + $0x8] sm:$0xff]
        %v310 = vld [vmem:[%s285 + $0x10] sm:$0x3]
        %v311 = vld [vmem:[%s285 + $0x18] sm:$0xff]
        %v312 = vld [vmem:[%s285 + $0x20] sm:$0xff]
        %v313 = vld [vmem:[%s285 + $0x28] sm:$0x3]
        %v314 = vld [vmem:[%s285 + $0x30] sm:$0xff]
        %v315 = vld [vmem:[%s285 + $0x38] sm:$0xff]
        %v316 = vld [vmem:[%s285 + $0x40] sm:$0x3]
        %v317 = vld [vmem:[%s285 + $0x48] sm:$0xff]
        %v318 = vld [vmem:[%s285 + $0x50] sm:$0xff]
        %v319 = vld [vmem:[%s285 + $0x58] sm:$0x3]
        %v320 = vld [vmem:[%s285 + $0x60] sm:$0xff]
        %v321 = vld [vmem:[%s285 + $0x68] sm:$0xff]
        %v322 = vld [vmem:[%s285 + $0x70] sm:$0x3]
        %v323 = vld [vmem:[%s285 + $0x78] sm:$0xff]
        %v324 = vld [vmem:[%s285 + $0x80] sm:$0xff]
        %v325 = vld [vmem:[%s285 + $0x88] sm:$0x3]
        %v326 = vld [vmem:[%s285 + $0x90] sm:$0xff]
        %v327 = vld [vmem:[%s285 + $0x98] sm:$0xff]
        %v328 = vld [vmem:[%s285 + $0xa0] sm:$0x3]
        %v329 = vld [vmem:[%s285 + $0xa8] sm:$0xff]
        %v330 = vld [vmem:[%s285 + $0xb0] sm:$0xff]
        %v331 = vld [vmem:[%s285 + $0xb8] sm:$0x3]
        %v332 = vld [vmem:[%s303] sm:$0xff]
        %v333 = vld [vmem:[%s303 + $0x8] sm:$0xff]
        %v334 = vld [vmem:[%s303 + $0x10] sm:$0x3]
        %v335 = vld [vmem:[%s303 + $0x18] sm:$0xff]
        %v336 = vld [vmem:[%s303 + $0x20] sm:$0xff]
        %v337 = vld [vmem:[%s303 + $0x28] sm:$0x3]
        %v338 = vld [vmem:[%s3] sm:$0x1]
        %vm369 = vcmask 1046528
        %v370 = vrot.slane %v308, 1
        %v371 = vrot.slane %v309, 1
        %v372 = vsel %vm369, %v370, %v371
        %v373 = vrot.slane %v310, 1
        %v374 = vsel %vm369, %v371, %v373
        %v375 = vrot.slane %v311, 1
        %v376 = vrot.slane %v312, 1
        %v377 = vsel %vm369, %v375, %v376
        %v378 = vrot.slane %v313, 1
        %v379 = vsel %vm369, %v376, %v378
        %v380 = vrot.slane %v314, 1
        %v381 = vrot.slane %v315, 1
        %v382 = vsel %vm369, %v380, %v381
        %v383 = vrot.slane %v316, 1
        %v384 = vsel %vm369, %v381, %v383
        %v385 = vrot.slane %v317, 1
        %v386 = vrot.slane %v318, 1
        %v387 = vsel %vm369, %v385, %v386
        %v388 = vrot.slane %v319, 1
        %v389 = vsel %vm369, %v386, %v388
        %v390 = vrot.slane %v320, 1
        %v391 = vrot.slane %v321, 1
        %v392 = vsel %vm369, %v390, %v391
        %v393 = vrot.slane %v322, 1
        %v394 = vsel %vm369, %v391, %v393
        %v395 = vrot.slane %v323, 1
        %v396 = vrot.slane %v324, 1
        %v397 = vsel %vm369, %v395, %v396
        %v398 = vrot.slane %v325, 1
        %v399 = vsel %vm369, %v396, %v398
        %v400 = vrot.slane %v326, 1
        %v401 = vrot.slane %v327, 1
        %v402 = vsel %vm369, %v400, %v401
        %v403 = vrot.slane %v328, 1
        %v404 = vsel %vm369, %v401, %v403
        %v405 = vrot.slane %v329, 1
        %v406 = vrot.slane %v330, 1
        %v407 = vsel %vm369, %v405, %v406
        %v408 = vrot.slane %v331, 1
        %v409 = vsel %vm369, %v406, %v408
        %v410 = vrot.slane %v332, 1
        %v411 = vrot.slane %v333, 1
        %v412 = vsel %vm369, %v410, %v411
        %v413 = vrot.slane %v334, 1
        %v414 = vsel %vm369, %v411, %v413
        %v415 = vrot.slane %v335, 1
        %v416 = vrot.slane %v336, 1
        %v417 = vsel %vm369, %v415, %v416
        %v418 = vrot.slane %v337, 1
        %v419 = vsel %vm369, %v416, %v418
        %420 = vrot.lane.b32.xlu0 %v372, 8
        %v421 = vpop.permute.xlu0 %420
        %422 = vrot.lane.b32.xlu0 %v374, 8
        %v423 = vpop.permute.xlu0 %422
        %424 = vrot.lane.b32.xlu0 %v377, 8
        %v425 = vpop.permute.xlu0 %424
        %426 = vrot.lane.b32.xlu0 %v379, 8
        %v427 = vpop.permute.xlu0 %426
        %428 = vrot.lane.b32.xlu0 %v382, 8
        %v429 = vpop.permute.xlu0 %428
        %430 = vrot.lane.b32.xlu0 %v384, 8
        %v431 = vpop.permute.xlu0 %430
        %432 = vrot.lane.b32.xlu0 %v387, 8
        %v433 = vpop.permute.xlu0 %432
        %434 = vrot.lane.b32.xlu0 %v389, 8
        %v435 = vpop.permute.xlu0 %434
        %436 = vrot.lane.b32.xlu0 %v392, 8
        %v437 = vpop.permute.xlu0 %436
        %438 = vrot.lane.b32.xlu0 %v394, 8
        %v439 = vpop.permute.xlu0 %438
        %440 = vrot.lane.b32.xlu0 %v397, 8
        %v441 = vpop.permute.xlu0 %440
        %442 = vrot.lane.b32.xlu0 %v399, 8
        %v443 = vpop.permute.xlu0 %442
        %444 = vrot.lane.b32.xlu0 %v402, 8
        %v445 = vpop.permute.xlu0 %444
        %446 = vrot.lane.b32.xlu0 %v404, 8
        %v447 = vpop.permute.xlu0 %446
        %448 = vrot.lane.b32.xlu0 %v407, 8
        %v449 = vpop.permute.xlu0 %448
        %450 = vrot.lane.b32.xlu0 %v409, 8
        %v451 = vpop.permute.xlu0 %450
        %452 = vrot.lane.b32.xlu0 %v412, 8
        %v453 = vpop.permute.xlu0 %452
        %454 = vrot.lane.b32.xlu0 %v414, 8
        %v455 = vpop.permute.xlu0 %454
        %456 = vrot.lane.b32.xlu0 %v417, 8
        %v457 = vpop.permute.xlu0 %456
        %458 = vrot.lane.b32.xlu0 %v419, 8
        %v459 = vpop.permute.xlu0 %458
        %vm480 = vcmask 1045504
        %v481 = vrot.slane %v308, 2
        %v482 = vrot.slane %v309, 2
        %v483 = vsel %vm480, %v481, %v482
        %v484 = vrot.slane %v310, 2
        %v485 = vsel %vm480, %v482, %v484
        %v486 = vrot.slane %v311, 2
        %v487 = vrot.slane %v312, 2
        %v488 = vsel %vm480, %v486, %v487
        %v489 = vrot.slane %v313, 2
        %v490 = vsel %vm480, %v487, %v489
        %v491 = vrot.slane %v314, 2
        %v492 = vrot.slane %v315, 2
        %v493 = vsel %vm480, %v491, %v492
        %v494 = vrot.slane %v316, 2
        %v495 = vsel %vm480, %v492, %v494
        %v496 = vrot.slane %v317, 2
        %v497 = vrot.slane %v318, 2
        %v498 = vsel %vm480, %v496, %v497
        %v499 = vrot.slane %v319, 2
        %v500 = vsel %vm480, %v497, %v499
        %v501 = vrot.slane %v320, 2
        %v502 = vrot.slane %v321, 2
        %v503 = vsel %vm480, %v501, %v502
        %v504 = vrot.slane %v322, 2
        %v505 = vsel %vm480, %v502, %v504
        %v506 = vrot.slane %v323, 2
        %v507 = vrot.slane %v324, 2
        %v508 = vsel %vm480, %v506, %v507
        %v509 = vrot.slane %v325, 2
        %v510 = vsel %vm480, %v507, %v509
        %v511 = vrot.slane %v326, 2
        %v512 = vrot.slane %v327, 2
        %v513 = vsel %vm480, %v511, %v512
        %v514 = vrot.slane %v328, 2
        %v515 = vsel %vm480, %v512, %v514
        %v516 = vrot.slane %v329, 2
        %v517 = vrot.slane %v330, 2
        %v518 = vsel %vm480, %v516, %v517
        %v519 = vrot.slane %v331, 2
        %v520 = vsel %vm480, %v517, %v519
        %v521 = vrot.slane %v332, 2
        %v522 = vrot.slane %v333, 2
        %v523 = vsel %vm480, %v521, %v522
        %v524 = vrot.slane %v334, 2
        %v525 = vsel %vm480, %v522, %v524
        %v526 = vrot.slane %v335, 2
        %v527 = vrot.slane %v336, 2
        %v528 = vsel %vm480, %v526, %v527
        %v529 = vrot.slane %v337, 2
        %v530 = vsel %vm480, %v527, %v529
        %531 = vrot.lane.b32.xlu0 %v483, 16
        %v532 = vpop.permute.xlu0 %531
        %533 = vrot.lane.b32.xlu0 %v485, 16
        %v534 = vpop.permute.xlu0 %533
        %535 = vrot.lane.b32.xlu0 %v488, 16
        %v536 = vpop.permute.xlu0 %535
        %537 = vrot.lane.b32.xlu0 %v490, 16
        %v538 = vpop.permute.xlu0 %537
        %539 = vrot.lane.b32.xlu0 %v493, 16
        %v540 = vpop.permute.xlu0 %539
        %541 = vrot.lane.b32.xlu0 %v495, 16
        %v542 = vpop.permute.xlu0 %541
        %543 = vrot.lane.b32.xlu0 %v498, 16
        %v544 = vpop.permute.xlu0 %543
        %545 = vrot.lane.b32.xlu0 %v500, 16
        %v546 = vpop.permute.xlu0 %545
        %547 = vrot.lane.b32.xlu0 %v503, 16
        %v548 = vpop.permute.xlu0 %547
        %549 = vrot.lane.b32.xlu0 %v505, 16
        %v550 = vpop.permute.xlu0 %549
        %551 = vrot.lane.b32.xlu0 %v508, 16
        %v552 = vpop.permute.xlu0 %551
        %553 = vrot.lane.b32.xlu0 %v510, 16
        %v554 = vpop.permute.xlu0 %553
        %555 = vrot.lane.b32.xlu0 %v513, 16
        %v556 = vpop.permute.xlu0 %555
        %557 = vrot.lane.b32.xlu0 %v515, 16
        %v558 = vpop.permute.xlu0 %557
        %559 = vrot.lane.b32.xlu0 %v518, 16
        %v560 = vpop.permute.xlu0 %559
        %561 = vrot.lane.b32.xlu0 %v520, 16
        %v562 = vpop.permute.xlu0 %561
        %563 = vrot.lane.b32.xlu0 %v523, 16
        %v564 = vpop.permute.xlu0 %563
        %565 = vrot.lane.b32.xlu0 %v525, 16
        %v566 = vpop.permute.xlu0 %565
        %567 = vrot.lane.b32.xlu0 %v528, 16
        %v568 = vpop.permute.xlu0 %567
        %569 = vrot.lane.b32.xlu0 %v530, 16
        %v570 = vpop.permute.xlu0 %569
        %vm591 = vcmask 64512
        %v592 = vsel %vm591, %v308, %v421
        %v593 = vsel %vm591, %v309, %v423
        %v594 = vsel %vm591, %v311, %v425
        %v595 = vsel %vm591, %v312, %v427
        %v596 = vsel %vm591, %v314, %v429
        %v597 = vsel %vm591, %v315, %v431
        %v598 = vsel %vm591, %v317, %v433
        %v599 = vsel %vm591, %v318, %v435
        %v600 = vsel %vm591, %v320, %v437
        %v601 = vsel %vm591, %v321, %v439
        %v602 = vsel %vm591, %v323, %v441
        %v603 = vsel %vm591, %v324, %v443
        %v604 = vsel %vm591, %v326, %v445
        %v605 = vsel %vm591, %v327, %v447
        %v606 = vsel %vm591, %v329, %v449
        %v607 = vsel %vm591, %v330, %v451
        %v608 = vsel %vm591, %v332, %v453
        %v609 = vsel %vm591, %v333, %v455
        %v610 = vsel %vm591, %v335, %v457
        %v611 = vsel %vm591, %v336, %v459
        %vm612 = vcmask 130048
        %v613 = vsel %vm612, %v592, %v532
        %v614 = vsel %vm612, %v593, %v534
        %v615 = vsel %vm612, %v594, %v536
        %v616 = vsel %vm612, %v595, %v538
        %v617 = vsel %vm612, %v596, %v540
        %v618 = vsel %vm612, %v597, %v542
        %v619 = vsel %vm612, %v598, %v544
        %v620 = vsel %vm612, %v599, %v546
        %v621 = vsel %vm612, %v600, %v548
        %v622 = vsel %vm612, %v601, %v550
        %v623 = vsel %vm612, %v602, %v552
        %v624 = vsel %vm612, %v603, %v554
        %v625 = vsel %vm612, %v604, %v556
        %v626 = vsel %vm612, %v605, %v558
        %v627 = vsel %vm612, %v606, %v560
        %v628 = vsel %vm612, %v607, %v562
        %v629 = vsel %vm612, %v608, %v564
        %v630 = vsel %vm612, %v609, %v566
        %v631 = vsel %vm612, %v610, %v568
        %v632 = vsel %vm612, %v611, %v570
        %v633 = vld [vmem:[%s2] sm:$0xff]
        %v634 = vld [vmem:[%s2 + $0x8] sm:$0xff]
        %v635 = vld [vmem:[%s2 + $0x10] sm:$0xff]
        %v637 = vlaneseq
        %v638 = vshrl.u32 %v637, 7
        %v639 = vsub.s32 0, %v638
        %v640 = vrot.slane %v338, %v639
        %vm642 = vcmask 195584
        %v644 = vsel %vm642, %v613, 0
        %v647 = vsel %vm642, %v614, 0
        %v650 = vsel %vm642, %v615, 0
        %v653 = vsel %vm642, %v616, 0
        %v656 = vsel %vm642, %v617, 0
        %v659 = vsel %vm642, %v618, 0
        %v662 = vsel %vm642, %v619, 0
        %v665 = vsel %vm642, %v620, 0
        %v668 = vsel %vm642, %v621, 0
        %v671 = vsel %vm642, %v622, 0
        %v674 = vsel %vm642, %v623, 0
        %v677 = vsel %vm642, %v624, 0
        %v680 = vsel %vm642, %v625, 0
        %v683 = vsel %vm642, %v626, 0
        %v686 = vsel %vm642, %v627, 0
        %v689 = vsel %vm642, %v628, 0
        %691 = vmatprep.subr.mxu0 0.0
        %692 = vmatpush1.msra.mxu0 %v633
        %693 = vmatprep.subr.mxu0 0.0
        %694 = vmatpush1.msra.mxu0 %v634
        %695 = vmatprep.subr.mxu0 0.0
        %696 = vmatpush1.msra.mxu0 %v635
        %697 = vmatprep.subr.mxu0 0.0
        %698 = vmatpush1.msra.mxu0 0.0
        %699 = vmatprep.subr.mxu0 0.0
        %700 = vmatpush1.msra.mxu0 0.0
        %701 = vmatprep.subr.mxu0 0.0
        %702 = vmatpush1.msra.mxu0 0.0
        %703 = vmatprep.subr.mxu0 0.0
        %704 = vmatpush1.msra.mxu0 0.0
        %705 = vmatprep.subr.mxu0 0.0
        %706 = vmatpush1.msra.mxu0 0.0
        %707 = vmatprep.subr.mxu0 0.0
        %708 = vmatpush1.msra.mxu0 0.0
        %709 = vmatprep.subr.mxu0 0.0
        %710 = vmatpush1.msra.mxu0 0.0
        %711 = vmatprep.subr.mxu0 0.0
        %712 = vmatpush1.msra.mxu0 0.0
        %713 = vmatprep.subr.mxu0 0.0
        %714 = vmatpush1.msra.mxu0 0.0
        %715 = vmatprep.subr.mxu0 0.0
        %716 = vmatpush1.msra.mxu0 0.0
        %717 = vmatprep.subr.mxu0 0.0
        %718 = vmatpush1.msra.mxu0 0.0
        %719 = vmatprep.subr.mxu0 0.0
        %720 = vmatpush1.msra.mxu0 0.0
        %721 = vmatprep.subr.mxu0 0.0
        %722 = vmatpush1.msra.mxu0 0.0
        %723 = vmatprep.subr.mxu0 0.0
        %724 = vmatpush1.msra.mxu0 0.0
        %725 = vmatprep.subr.mxu0 0.0
        %726 = vmatpush1.msra.mxu0 0.0
        %727 = vmatprep.subr.mxu0 0.0
        %728 = vmatpush1.msra.mxu0 0.0
        %729 = vmatprep.subr.mxu0 0.0
        %730 = vmatpush1.msra.mxu0 0.0
        %731 = vmatprep.subr.mxu0 0.0
        %732 = vmatpush1.msra.mxu0 0.0
        %733 = vmatprep.subr.mxu0 0.0
        %734 = vmatpush1.msra.mxu0 0.0
        %735 = vmatprep.subr.mxu0 0.0
        %736 = vmatpush1.msra.mxu0 0.0
        %737 = vmatprep.subr.mxu0 0.0
        %738 = vmatpush1.msra.mxu0 0.0
        %739 = vmatprep.subr.mxu0 0.0
        %740 = vmatpush1.msra.mxu0 0.0
        %741 = vmatprep.subr.mxu0 0.0
        %742 = vmatpush1.msra.mxu0 0.0
        %743 = vmatprep.subr.mxu0 0.0
        %744 = vmatpush1.msra.mxu0 0.0
        %745 = vmatprep.subr.mxu0 0.0
        %746 = vmatpush1.msra.mxu0 0.0
        %747 = vmatprep.subr.mxu0 0.0
        %748 = vmatpush1.msra.mxu0 0.0
        %749 = vmatprep.subr.mxu0 0.0
        %750 = vmatpush1.msra.mxu0 0.0
        %751 = vmatprep.subr.mxu0 0.0
        %752 = vmatpush1.msra.mxu0 0.0
        %753 = vmatprep.subr.mxu0 0.0
        %754 = vmatpush1.msra.mxu0 0.0
        %755 = vmatprep.mubr.f32.mxu0 0.0
        %756 = vmatmul.mubr.f32.gmra.mrb[0].mxu0 %v644
        %v757 = vpop.f32.mrb[0].mxu0
        %v758 = vadd.f32 %v640, %v757
        %v759 = vpop.f32.mrb[0].mxu0
        %760 = vmatprep.mubr.f32.mxu0 0.0
        %761 = vmatmul.mubr.f32.gmra.mrb[0].mxu0 %v647
        %v762 = vpop.f32.mrb[0].mxu0
        %v763 = vadd.f32 %v640, %v762
        %v764 = vpop.f32.mrb[0].mxu0
        %765 = vmatprep.mubr.f32.mxu0 0.0
        %766 = vmatmul.mubr.f32.gmra.mrb[0].mxu0 %v650
        %v767 = vpop.f32.mrb[0].mxu0
        %v768 = vadd.f32 %v640, %v767
        %v769 = vpop.f32.mrb[0].mxu0
        %770 = vmatprep.mubr.f32.mxu0 0.0
        %771 = vmatmul.mubr.f32.gmra.mrb[0].mxu0 %v653
        %v772 = vpop.f32.mrb[0].mxu0
        %v773 = vadd.f32 %v640, %v772
        %v774 = vpop.f32.mrb[0].mxu0
        %775 = vmatprep.mubr.f32.mxu0 0.0
        %776 = vmatmul.mubr.f32.gmra.mrb[0].mxu0 %v656
        %v777 = vpop.f32.mrb[0].mxu0
        %v778 = vadd.f32 %v640, %v777
        %v779 = vpop.f32.mrb[0].mxu0
        %780 = vmatprep.mubr.f32.mxu0 0.0
        %781 = vmatmul.mubr.f32.gmra.mrb[0].mxu0 %v659
        %v782 = vpop.f32.mrb[0].mxu0
        %v783 = vadd.f32 %v640, %v782
        %v784 = vpop.f32.mrb[0].mxu0
        %785 = vmatprep.mubr.f32.mxu0 0.0
        %786 = vmatmul.mubr.f32.gmra.mrb[0].mxu0 %v662
        %v787 = vpop.f32.mrb[0].mxu0
        %v788 = vadd.f32 %v640, %v787
        %v789 = vpop.f32.mrb[0].mxu0
        %790 = vmatprep.mubr.f32.mxu0 0.0
        %791 = vmatmul.mubr.f32.gmra.mrb[0].mxu0 %v665
        %v792 = vpop.f32.mrb[0].mxu0
        %v793 = vadd.f32 %v640, %v792
        %v794 = vpop.f32.mrb[0].mxu0
        %795 = vmatprep.mubr.f32.mxu0 0.0
        %796 = vmatmul.mubr.f32.gmra.mrb[0].mxu0 %v668
        %v797 = vpop.f32.mrb[0].mxu0
        %v798 = vadd.f32 %v640, %v797
        %v799 = vpop.f32.mrb[0].mxu0
        %800 = vmatprep.mubr.f32.mxu0 0.0
        %801 = vmatmul.mubr.f32.gmra.mrb[0].mxu0 %v671
        %v802 = vpop.f32.mrb[0].mxu0
        %v803 = vadd.f32 %v640, %v802
        %v804 = vpop.f32.mrb[0].mxu0
        %805 = vmatprep.mubr.f32.mxu0 0.0
        %806 = vmatmul.mubr.f32.gmra.mrb[0].mxu0 %v674
        %v807 = vpop.f32.mrb[0].mxu0
        %v808 = vadd.f32 %v640, %v807
        %v809 = vpop.f32.mrb[0].mxu0
        %810 = vmatprep.mubr.f32.mxu0 0.0
        %811 = vmatmul.mubr.f32.gmra.mrb[0].mxu0 %v677
        %v812 = vpop.f32.mrb[0].mxu0
        %v813 = vadd.f32 %v640, %v812
        %v814 = vpop.f32.mrb[0].mxu0
        %815 = vmatprep.mubr.f32.mxu0 0.0
        %816 = vmatmul.mubr.f32.gmra.mrb[0].mxu0 %v680
        %v817 = vpop.f32.mrb[0].mxu0
        %v818 = vadd.f32 %v640, %v817
        %v819 = vpop.f32.mrb[0].mxu0
        %820 = vmatprep.mubr.f32.mxu0 0.0
        %821 = vmatmul.mubr.f32.gmra.mrb[0].mxu0 %v683
        %v822 = vpop.f32.mrb[0].mxu0
        %v823 = vadd.f32 %v640, %v822
        %v824 = vpop.f32.mrb[0].mxu0
        %825 = vmatprep.mubr.f32.mxu0 0.0
        %826 = vmatmul.mubr.f32.gmra.mrb[0].mxu0 %v686
        %v827 = vpop.f32.mrb[0].mxu0
        %v828 = vadd.f32 %v640, %v827
        %v829 = vpop.f32.mrb[0].mxu0
        %830 = vmatprep.mubr.f32.mxu0 0.0
        %831 = vmatmul.mubr.f32.gmra.mrb[0].mxu0 %v689
        %v832 = vpop.f32.mrb[0].mxu0
        %v833 = vadd.f32 %v640, %v832
        %v834 = vpop.f32.mrb[0].mxu0
        %835 = vdwg.mxu0
        %s836 = scalar_lea.vmem %s2, 24
        %v837 = vld [vmem:[%s836] sm:$0xff]
        %v838 = vld [vmem:[%s836 + $0x8] sm:$0xff]
        %v839 = vld [vmem:[%s836 + $0x10] sm:$0xff]
        %v841 = vsel %vm642, %v629, 0
        %v844 = vsel %vm642, %v630, 0
        %846 = vmatprep.subr.mxu0 0.0
        %847 = vmatpush1.msra.mxu0 %v837
        %848 = vmatprep.subr.mxu0 0.0
        %849 = vmatpush1.msra.mxu0 %v838
        %850 = vmatprep.subr.mxu0 0.0
        %851 = vmatpush1.msra.mxu0 %v839
        %852 = vmatprep.subr.mxu0 0.0
        %853 = vmatpush1.msra.mxu0 0.0
        %854 = vmatprep.subr.mxu0 0.0
        %855 = vmatpush1.msra.mxu0 0.0
        %856 = vmatprep.subr.mxu0 0.0
        %857 = vmatpush1.msra.mxu0 0.0
        %858 = vmatprep.subr.mxu0 0.0
        %859 = vmatpush1.msra.mxu0 0.0
        %860 = vmatprep.subr.mxu0 0.0
        %861 = vmatpush1.msra.mxu0 0.0
        %862 = vmatprep.subr.mxu0 0.0
        %863 = vmatpush1.msra.mxu0 0.0
        %864 = vmatprep.subr.mxu0 0.0
        %865 = vmatpush1.msra.mxu0 0.0
        %866 = vmatprep.subr.mxu0 0.0
        %867 = vmatpush1.msra.mxu0 0.0
        %868 = vmatprep.subr.mxu0 0.0
        %869 = vmatpush1.msra.mxu0 0.0
        %870 = vmatprep.subr.mxu0 0.0
        %871 = vmatpush1.msra.mxu0 0.0
        %872 = vmatprep.subr.mxu0 0.0
        %873 = vmatpush1.msra.mxu0 0.0
        %874 = vmatprep.subr.mxu0 0.0
        %875 = vmatpush1.msra.mxu0 0.0
        %876 = vmatprep.subr.mxu0 0.0
        %877 = vmatpush1.msra.mxu0 0.0
        %878 = vmatprep.subr.mxu0 0.0
        %879 = vmatpush1.msra.mxu0 0.0
        %880 = vmatprep.subr.mxu0 0.0
        %881 = vmatpush1.msra.mxu0 0.0
        %882 = vmatprep.subr.mxu0 0.0
        %883 = vmatpush1.msra.mxu0 0.0
        %884 = vmatprep.subr.mxu0 0.0
        %885 = vmatpush1.msra.mxu0 0.0
        %886 = vmatprep.subr.mxu0 0.0
        %887 = vmatpush1.msra.mxu0 0.0
        %888 = vmatprep.subr.mxu0 0.0
        %889 = vmatpush1.msra.mxu0 0.0
        %890 = vmatprep.subr.mxu0 0.0
        %891 = vmatpush1.msra.mxu0 0.0
        %892 = vmatprep.subr.mxu0 0.0
        %893 = vmatpush1.msra.mxu0 0.0
        %894 = vmatprep.subr.mxu0 0.0
        %895 = vmatpush1.msra.mxu0 0.0
        %896 = vmatprep.subr.mxu0 0.0
        %897 = vmatpush1.msra.mxu0 0.0
        %898 = vmatprep.subr.mxu0 0.0
        %899 = vmatpush1.msra.mxu0 0.0
        %900 = vmatprep.subr.mxu0 0.0
        %901 = vmatpush1.msra.mxu0 0.0
        %902 = vmatprep.subr.mxu0 0.0
        %903 = vmatpush1.msra.mxu0 0.0
        %904 = vmatprep.subr.mxu0 0.0
        %905 = vmatpush1.msra.mxu0 0.0
        %906 = vmatprep.subr.mxu0 0.0
        %907 = vmatpush1.msra.mxu0 0.0
        %908 = vmatprep.subr.mxu0 0.0
        %909 = vmatpush1.msra.mxu0 0.0
        %910 = vmatprep.mubr.f32.mxu0 0.0
        %911 = vmatmul.mubr.f32.gmra.mrb[0].mxu0 %v650
        %v912 = vpop.f32.mrb[0].mxu0
        %v913 = vadd.f32 0.0, %v912
        %v914 = vpop.f32.mrb[0].mxu0
        %915 = vmatprep.mubr.f32.mxu0 0.0
        %916 = vmatmul.mubr.f32.gmra.mrb[0].mxu0 %v653
        %v917 = vpop.f32.mrb[0].mxu0
        %v918 = vadd.f32 0.0, %v917
        %v919 = vpop.f32.mrb[0].mxu0
        %920 = vmatprep.mubr.f32.mxu0 0.0
        %921 = vmatmul.mubr.f32.gmra.mrb[0].mxu0 %v656
        %v922 = vpop.f32.mrb[0].mxu0
        %v923 = vadd.f32 0.0, %v922
        %v924 = vpop.f32.mrb[0].mxu0
        %925 = vmatprep.mubr.f32.mxu0 0.0
        %926 = vmatmul.mubr.f32.gmra.mrb[0].mxu0 %v659
        %v927 = vpop.f32.mrb[0].mxu0
        %v928 = vadd.f32 0.0, %v927
        %v929 = vpop.f32.mrb[0].mxu0
        %930 = vmatprep.mubr.f32.mxu0 0.0
        %931 = vmatmul.mubr.f32.gmra.mrb[0].mxu0 %v662
        %v932 = vpop.f32.mrb[0].mxu0
        %v933 = vadd.f32 0.0, %v932
        %v934 = vpop.f32.mrb[0].mxu0
        %935 = vmatprep.mubr.f32.mxu0 0.0
        %936 = vmatmul.mubr.f32.gmra.mrb[0].mxu0 %v665
        %v937 = vpop.f32.mrb[0].mxu0
        %v938 = vadd.f32 0.0, %v937
        %v939 = vpop.f32.mrb[0].mxu0
        %940 = vmatprep.mubr.f32.mxu0 0.0
        %941 = vmatmul.mubr.f32.gmra.mrb[0].mxu0 %v668
        %v942 = vpop.f32.mrb[0].mxu0
        %v943 = vadd.f32 0.0, %v942
        %v944 = vpop.f32.mrb[0].mxu0
        %945 = vmatprep.mubr.f32.mxu0 0.0
        %946 = vmatmul.mubr.f32.gmra.mrb[0].mxu0 %v671
        %v947 = vpop.f32.mrb[0].mxu0
        %v948 = vadd.f32 0.0, %v947
        %v949 = vpop.f32.mrb[0].mxu0
        %950 = vmatprep.mubr.f32.mxu0 0.0
        %951 = vmatmul.mubr.f32.gmra.mrb[0].mxu0 %v674
        %v952 = vpop.f32.mrb[0].mxu0
        %v953 = vadd.f32 0.0, %v952
        %v954 = vpop.f32.mrb[0].mxu0
        %955 = vmatprep.mubr.f32.mxu0 0.0
        %956 = vmatmul.mubr.f32.gmra.mrb[0].mxu0 %v677
        %v957 = vpop.f32.mrb[0].mxu0
        %v958 = vadd.f32 0.0, %v957
        %v959 = vpop.f32.mrb[0].mxu0
        %960 = vmatprep.mubr.f32.mxu0 0.0
        %961 = vmatmul.mubr.f32.gmra.mrb[0].mxu0 %v680
        %v962 = vpop.f32.mrb[0].mxu0
        %v963 = vadd.f32 0.0, %v962
        %v964 = vpop.f32.mrb[0].mxu0
        %965 = vmatprep.mubr.f32.mxu0 0.0
        %966 = vmatmul.mubr.f32.gmra.mrb[0].mxu0 %v683
        %v967 = vpop.f32.mrb[0].mxu0
        %v968 = vadd.f32 0.0, %v967
        %v969 = vpop.f32.mrb[0].mxu0
        %970 = vmatprep.mubr.f32.mxu0 0.0
        %971 = vmatmul.mubr.f32.gmra.mrb[0].mxu0 %v686
        %v972 = vpop.f32.mrb[0].mxu0
        %v973 = vadd.f32 0.0, %v972
        %v974 = vpop.f32.mrb[0].mxu0
        %975 = vmatprep.mubr.f32.mxu0 0.0
        %976 = vmatmul.mubr.f32.gmra.mrb[0].mxu0 %v689
        %v977 = vpop.f32.mrb[0].mxu0
        %v978 = vadd.f32 0.0, %v977
        %v979 = vpop.f32.mrb[0].mxu0
        %980 = vmatprep.mubr.f32.mxu0 0.0
        %981 = vmatmul.mubr.f32.gmra.mrb[0].mxu0 %v841
        %v982 = vpop.f32.mrb[0].mxu0
        %v983 = vadd.f32 0.0, %v982
        %v984 = vpop.f32.mrb[0].mxu0
        %985 = vmatprep.mubr.f32.mxu0 0.0
        %986 = vmatmul.mubr.f32.gmra.mrb[0].mxu0 %v844
        %v987 = vpop.f32.mrb[0].mxu0
        %v988 = vadd.f32 0.0, %v987
        %v989 = vpop.f32.mrb[0].mxu0
        %990 = vdwg.mxu0
        %v991 = vadd.f32 %v758, %v913
        %v992 = vadd.f32 %v763, %v918
        %v993 = vadd.f32 %v768, %v923
        %v994 = vadd.f32 %v773, %v928
        %v995 = vadd.f32 %v778, %v933
        %v996 = vadd.f32 %v783, %v938
        %v997 = vadd.f32 %v788, %v943
        %v998 = vadd.f32 %v793, %v948
        %v999 = vadd.f32 %v798, %v953
        %v1000 = vadd.f32 %v803, %v958
        %v1001 = vadd.f32 %v808, %v963
        %v1002 = vadd.f32 %v813, %v968
        %v1003 = vadd.f32 %v818, %v973
        %v1004 = vadd.f32 %v823, %v978
        %v1005 = vadd.f32 %v828, %v983
        %v1006 = vadd.f32 %v833, %v988
        %s1007 = scalar_lea.vmem %s2, 48
        %v1008 = vld [vmem:[%s1007] sm:$0xff]
        %v1009 = vld [vmem:[%s1007 + $0x8] sm:$0xff]
        %v1010 = vld [vmem:[%s1007 + $0x10] sm:$0xff]
        %v1012 = vsel %vm642, %v631, 0
        %v1015 = vsel %vm642, %v632, 0
        %1017 = vmatprep.subr.mxu0 0.0
        %1018 = vmatpush1.msra.mxu0 %v1008
        %1019 = vmatprep.subr.mxu0 0.0
        %1020 = vmatpush1.msra.mxu0 %v1009
        %1021 = vmatprep.subr.mxu0 0.0
        %1022 = vmatpush1.msra.mxu0 %v1010
        %1023 = vmatprep.subr.mxu0 0.0
        %1024 = vmatpush1.msra.mxu0 0.0
        %1025 = vmatprep.subr.mxu0 0.0
        %1026 = vmatpush1.msra.mxu0 0.0
        %1027 = vmatprep.subr.mxu0 0.0
        %1028 = vmatpush1.msra.mxu0 0.0
        %1029 = vmatprep.subr.mxu0 0.0
        %1030 = vmatpush1.msra.mxu0 0.0
        %1031 = vmatprep.subr.mxu0 0.0
        %1032 = vmatpush1.msra.mxu0 0.0
        %1033 = vmatprep.subr.mxu0 0.0
        %1034 = vmatpush1.msra.mxu0 0.0
        %1035 = vmatprep.subr.mxu0 0.0
        %1036 = vmatpush1.msra.mxu0 0.0
        %1037 = vmatprep.subr.mxu0 0.0
        %1038 = vmatpush1.msra.mxu0 0.0
        %1039 = vmatprep.subr.mxu0 0.0
        %1040 = vmatpush1.msra.mxu0 0.0
        %1041 = vmatprep.subr.mxu0 0.0
        %1042 = vmatpush1.msra.mxu0 0.0
        %1043 = vmatprep.subr.mxu0 0.0
        %1044 = vmatpush1.msra.mxu0 0.0
        %1045 = vmatprep.subr.mxu0 0.0
        %1046 = vmatpush1.msra.mxu0 0.0
        %1047 = vmatprep.subr.mxu0 0.0
        %1048 = vmatpush1.msra.mxu0 0.0
        %1049 = vmatprep.subr.mxu0 0.0
        %1050 = vmatpush1.msra.mxu0 0.0
        %1051 = vmatprep.subr.mxu0 0.0
        %1052 = vmatpush1.msra.mxu0 0.0
        %1053 = vmatprep.subr.mxu0 0.0
        %1054 = vmatpush1.msra.mxu0 0.0
        %1055 = vmatprep.subr.mxu0 0.0
        %1056 = vmatpush1.msra.mxu0 0.0
        %1057 = vmatprep.subr.mxu0 0.0
        %1058 = vmatpush1.msra.mxu0 0.0
        %1059 = vmatprep.subr.mxu0 0.0
        %1060 = vmatpush1.msra.mxu0 0.0
        %1061 = vmatprep.subr.mxu0 0.0
        %1062 = vmatpush1.msra.mxu0 0.0
        %1063 = vmatprep.subr.mxu0 0.0
        %1064 = vmatpush1.msra.mxu0 0.0
        %1065 = vmatprep.subr.mxu0 0.0
        %1066 = vmatpush1.msra.mxu0 0.0
        %1067 = vmatprep.subr.mxu0 0.0
        %1068 = vmatpush1.msra.mxu0 0.0
        %1069 = vmatprep.subr.mxu0 0.0
        %1070 = vmatpush1.msra.mxu0 0.0
        %1071 = vmatprep.subr.mxu0 0.0
        %1072 = vmatpush1.msra.mxu0 0.0
        %1073 = vmatprep.subr.mxu0 0.0
        %1074 = vmatpush1.msra.mxu0 0.0
        %1075 = vmatprep.subr.mxu0 0.0
        %1076 = vmatpush1.msra.mxu0 0.0
        %1077 = vmatprep.subr.mxu0 0.0
        %1078 = vmatpush1.msra.mxu0 0.0
        %1079 = vmatprep.subr.mxu0 0.0
        %1080 = vmatpush1.msra.mxu0 0.0
        %1081 = vmatprep.mubr.f32.mxu0 0.0
        %1082 = vmatmul.mubr.f32.gmra.mrb[0].mxu0 %v656
        %v1083 = vpop.f32.mrb[0].mxu0
        %v1084 = vadd.f32 0.0, %v1083
        %v1085 = vpop.f32.mrb[0].mxu0
        %1086 = vmatprep.mubr.f32.mxu0 0.0
        %1087 = vmatmul.mubr.f32.gmra.mrb[0].mxu0 %v659
        %v1088 = vpop.f32.mrb[0].mxu0
        %v1089 = vadd.f32 0.0, %v1088
        %v1090 = vpop.f32.mrb[0].mxu0
        %1091 = vmatprep.mubr.f32.mxu0 0.0
        %1092 = vmatmul.mubr.f32.gmra.mrb[0].mxu0 %v662
        %v1093 = vpop.f32.mrb[0].mxu0
        %v1094 = vadd.f32 0.0, %v1093
        %v1095 = vpop.f32.mrb[0].mxu0
        %1096 = vmatprep.mubr.f32.mxu0 0.0
        %1097 = vmatmul.mubr.f32.gmra.mrb[0].mxu0 %v665
        %v1098 = vpop.f32.mrb[0].mxu0
        %v1099 = vadd.f32 0.0, %v1098
        %v1100 = vpop.f32.mrb[0].mxu0
        %1101 = vmatprep.mubr.f32.mxu0 0.0
        %1102 = vmatmul.mubr.f32.gmra.mrb[0].mxu0 %v668
        %v1103 = vpop.f32.mrb[0].mxu0
        %v1104 = vadd.f32 0.0, %v1103
        %v1105 = vpop.f32.mrb[0].mxu0
        %1106 = vmatprep.mubr.f32.mxu0 0.0
        %1107 = vmatmul.mubr.f32.gmra.mrb[0].mxu0 %v671
        %v1108 = vpop.f32.mrb[0].mxu0
        %v1109 = vadd.f32 0.0, %v1108
        %v1110 = vpop.f32.mrb[0].mxu0
        %1111 = vmatprep.mubr.f32.mxu0 0.0
        %1112 = vmatmul.mubr.f32.gmra.mrb[0].mxu0 %v674
        %v1113 = vpop.f32.mrb[0].mxu0
        %v1114 = vadd.f32 0.0, %v1113
        %v1115 = vpop.f32.mrb[0].mxu0
        %1116 = vmatprep.mubr.f32.mxu0 0.0
        %1117 = vmatmul.mubr.f32.gmra.mrb[0].mxu0 %v677
        %v1118 = vpop.f32.mrb[0].mxu0
        %v1119 = vadd.f32 0.0, %v1118
        %v1120 = vpop.f32.mrb[0].mxu0
        %1121 = vmatprep.mubr.f32.mxu0 0.0
        %1122 = vmatmul.mubr.f32.gmra.mrb[0].mxu0 %v680
        %v1123 = vpop.f32.mrb[0].mxu0
        %v1124 = vadd.f32 0.0, %v1123
        %v1125 = vpop.f32.mrb[0].mxu0
        %1126 = vmatprep.mubr.f32.mxu0 0.0
        %1127 = vmatmul.mubr.f32.gmra.mrb[0].mxu0 %v683
        %v1128 = vpop.f32.mrb[0].mxu0
        %v1129 = vadd.f32 0.0, %v1128
        %v1130 = vpop.f32.mrb[0].mxu0
        %1131 = vmatprep.mubr.f32.mxu0 0.0
        %1132 = vmatmul.mubr.f32.gmra.mrb[0].mxu0 %v686
        %v1133 = vpop.f32.mrb[0].mxu0
        %v1134 = vadd.f32 0.0, %v1133
        %v1135 = vpop.f32.mrb[0].mxu0
        %1136 = vmatprep.mubr.f32.mxu0 0.0
        %1137 = vmatmul.mubr.f32.gmra.mrb[0].mxu0 %v689
        %v1138 = vpop.f32.mrb[0].mxu0
        %v1139 = vadd.f32 0.0, %v1138
        %v1140 = vpop.f32.mrb[0].mxu0
        %1141 = vmatprep.mubr.f32.mxu0 0.0
        %1142 = vmatmul.mubr.f32.gmra.mrb[0].mxu0 %v841
        %v1143 = vpop.f32.mrb[0].mxu0
        %v1144 = vadd.f32 0.0, %v1143
        %v1145 = vpop.f32.mrb[0].mxu0
        %1146 = vmatprep.mubr.f32.mxu0 0.0
        %1147 = vmatmul.mubr.f32.gmra.mrb[0].mxu0 %v844
        %v1148 = vpop.f32.mrb[0].mxu0
        %v1149 = vadd.f32 0.0, %v1148
        %v1150 = vpop.f32.mrb[0].mxu0
        %1151 = vmatprep.mubr.f32.mxu0 0.0
        %1152 = vmatmul.mubr.f32.gmra.mrb[0].mxu0 %v1012
        %v1153 = vpop.f32.mrb[0].mxu0
        %v1154 = vadd.f32 0.0, %v1153
        %v1155 = vpop.f32.mrb[0].mxu0
        %1156 = vmatprep.mubr.f32.mxu0 0.0
        %1157 = vmatmul.mubr.f32.gmra.mrb[0].mxu0 %v1015
        %v1158 = vpop.f32.mrb[0].mxu0
        %v1159 = vadd.f32 0.0, %v1158
        %v1160 = vpop.f32.mrb[0].mxu0
        %1161 = vdwg.mxu0
        %v1162 = vadd.f32 %v991, %v1084
        %v1163 = vadd.f32 %v992, %v1089
        %v1164 = vadd.f32 %v993, %v1094
        %v1165 = vadd.f32 %v994, %v1099
        %v1166 = vadd.f32 %v995, %v1104
        %v1167 = vadd.f32 %v996, %v1109
        %v1168 = vadd.f32 %v997, %v1114
        %v1169 = vadd.f32 %v998, %v1119
        %v1170 = vadd.f32 %v999, %v1124
        %v1171 = vadd.f32 %v1000, %v1129
        %v1172 = vadd.f32 %v1001, %v1134
        %v1173 = vadd.f32 %v1002, %v1139
        %v1174 = vadd.f32 %v1003, %v1144
        %v1175 = vadd.f32 %v1004, %v1149
        %v1176 = vadd.f32 %v1005, %v1154
        %v1177 = vadd.f32 %v1006, %v1159
        %v1178 = vsub.f32 0.0, %v1162
        %v1179 = vsub.f32 0.0, %v1163
        %v1180 = vsub.f32 0.0, %v1164
        %v1181 = vsub.f32 0.0, %v1165
        %v1182 = vsub.f32 0.0, %v1166
        %v1183 = vsub.f32 0.0, %v1167
        %v1184 = vsub.f32 0.0, %v1168
        %v1185 = vsub.f32 0.0, %v1169
        %v1186 = vsub.f32 0.0, %v1170
        %v1187 = vsub.f32 0.0, %v1171
        %v1188 = vsub.f32 0.0, %v1172
        %v1189 = vsub.f32 0.0, %v1173
        %v1190 = vsub.f32 0.0, %v1174
        %v1191 = vsub.f32 0.0, %v1175
        %v1192 = vsub.f32 0.0, %v1176
        %v1193 = vsub.f32 0.0, %v1177
        %v1194 = vmul.f32 %v1178, 1.442695
        %v1195 = vpow.pop %v1194
        %v1196 = vmul.f32 %v1179, 1.442695
        %v1197 = vpow.pop %v1196
        %v1198 = vmul.f32 %v1180, 1.442695
        %v1199 = vpow.pop %v1198
        %v1200 = vmul.f32 %v1181, 1.442695
        %v1201 = vpow.pop %v1200
        %v1202 = vmul.f32 %v1182, 1.442695
        %v1203 = vpow.pop %v1202
        %v1204 = vmul.f32 %v1183, 1.442695
        %v1205 = vpow.pop %v1204
        %v1206 = vmul.f32 %v1184, 1.442695
        %v1207 = vpow.pop %v1206
        %v1208 = vmul.f32 %v1185, 1.442695
        %v1209 = vpow.pop %v1208
        %v1210 = vmul.f32 %v1186, 1.442695
        %v1211 = vpow.pop %v1210
        %v1212 = vmul.f32 %v1187, 1.442695
        %v1213 = vpow.pop %v1212
        %v1214 = vmul.f32 %v1188, 1.442695
        %v1215 = vpow.pop %v1214
        %v1216 = vmul.f32 %v1189, 1.442695
        %v1217 = vpow.pop %v1216
        %v1218 = vmul.f32 %v1190, 1.442695
        %v1219 = vpow.pop %v1218
        %v1220 = vmul.f32 %v1191, 1.442695
        %v1221 = vpow.pop %v1220
        %v1222 = vmul.f32 %v1192, 1.442695
        %v1223 = vpow.pop %v1222
        %v1224 = vmul.f32 %v1193, 1.442695
        %v1225 = vpow.pop %v1224
        %v1226 = vadd.f32 %v1195, 1.0
        %v1227 = vadd.f32 %v1197, 1.0
        %v1228 = vadd.f32 %v1199, 1.0
        %v1229 = vadd.f32 %v1201, 1.0
        %v1230 = vadd.f32 %v1203, 1.0
        %v1231 = vadd.f32 %v1205, 1.0
        %v1232 = vadd.f32 %v1207, 1.0
        %v1233 = vadd.f32 %v1209, 1.0
        %v1234 = vadd.f32 %v1211, 1.0
        %v1235 = vadd.f32 %v1213, 1.0
        %v1236 = vadd.f32 %v1215, 1.0
        %v1237 = vadd.f32 %v1217, 1.0
        %v1238 = vadd.f32 %v1219, 1.0
        %v1239 = vadd.f32 %v1221, 1.0
        %v1240 = vadd.f32 %v1223, 1.0
        %v1241 = vadd.f32 %v1225, 1.0
        %v1242 = vrcp.pop %v1226
        %v1243 = vmul.f32 1.0, %v1242
        %v1244 = vrcp.pop %v1227
        %v1245 = vmul.f32 1.0, %v1244
        %v1246 = vrcp.pop %v1228
        %v1247 = vmul.f32 1.0, %v1246
        %v1248 = vrcp.pop %v1229
        %v1249 = vmul.f32 1.0, %v1248
        %v1250 = vrcp.pop %v1230
        %v1251 = vmul.f32 1.0, %v1250
        %v1252 = vrcp.pop %v1231
        %v1253 = vmul.f32 1.0, %v1252
        %v1254 = vrcp.pop %v1232
        %v1255 = vmul.f32 1.0, %v1254
        %v1256 = vrcp.pop %v1233
        %v1257 = vmul.f32 1.0, %v1256
        %v1258 = vrcp.pop %v1234
        %v1259 = vmul.f32 1.0, %v1258
        %v1260 = vrcp.pop %v1235
        %v1261 = vmul.f32 1.0, %v1260
        %v1262 = vrcp.pop %v1236
        %v1263 = vmul.f32 1.0, %v1262
        %v1264 = vrcp.pop %v1237
        %v1265 = vmul.f32 1.0, %v1264
        %v1266 = vrcp.pop %v1238
        %v1267 = vmul.f32 1.0, %v1266
        %v1268 = vrcp.pop %v1239
        %v1269 = vmul.f32 1.0, %v1268
        %v1270 = vrcp.pop %v1240
        %v1271 = vmul.f32 1.0, %v1270
        %v1272 = vrcp.pop %v1241
        %v1273 = vmul.f32 1.0, %v1272
        %v1274 = vmul.f32 %v1162, %v1243
        %v1275 = vmul.f32 %v1163, %v1245
        %v1276 = vmul.f32 %v1164, %v1247
        %v1277 = vmul.f32 %v1165, %v1249
        %v1278 = vmul.f32 %v1166, %v1251
        %v1279 = vmul.f32 %v1167, %v1253
        %v1280 = vmul.f32 %v1168, %v1255
        %v1281 = vmul.f32 %v1169, %v1257
        %v1282 = vmul.f32 %v1170, %v1259
        %v1283 = vmul.f32 %v1171, %v1261
        %v1284 = vmul.f32 %v1172, %v1263
        %v1285 = vmul.f32 %v1173, %v1265
        %v1286 = vmul.f32 %v1174, %v1267
        %v1287 = vmul.f32 %v1175, %v1269
        %v1288 = vmul.f32 %v1176, %v1271
        %v1289 = vmul.f32 %v1177, %v1273
        %1290 = vst [vmem:[%s270] sm:$0xff] %v1274
        %1291 = vst [vmem:[%s270 + $0x8] sm:$0xff] %v1275
        %1292 = vst [vmem:[%s270 + $0x10] sm:$0xff] %v1276
        %1293 = vst [vmem:[%s270 + $0x18] sm:$0xff] %v1277
        %1294 = vst [vmem:[%s270 + $0x20] sm:$0xff] %v1278
        %1295 = vst [vmem:[%s270 + $0x28] sm:$0xff] %v1279
        %1296 = vst [vmem:[%s270 + $0x30] sm:$0xff] %v1280
        %1297 = vst [vmem:[%s270 + $0x38] sm:$0xff] %v1281
        %1298 = vst [vmem:[%s270 + $0x40] sm:$0xff] %v1282
        %1299 = vst [vmem:[%s270 + $0x48] sm:$0xff] %v1283
        %1300 = vst [vmem:[%s270 + $0x50] sm:$0xff] %v1284
        %1301 = vst [vmem:[%s270 + $0x58] sm:$0xff] %v1285
        %1302 = vst [vmem:[%s270 + $0x60] sm:$0xff] %v1286
        %1303 = vst [vmem:[%s270 + $0x68] sm:$0xff] %v1287
        %1304 = vst [vmem:[%s270 + $0x70] sm:$0xff] %v1288
        %1305 = vst [vmem:[%s270 + $0x78] sm:$0xff] %v1289
        %s1306 = sand.u32 %s142, 1
        %s1307 = scalar_lea.sflag [#allocation3], %s1306
        %s1308 = sand.u32 %s142, 1
        %s1309 = smul.addr %s1308, 128
        %s1310 = scalar_lea.vmem [#allocation2], %s1309
        // Predicated region
        $region37: #{tpu_custom_call.1} parent=35 // pred_check
          %p1311 = pneg %p152
        $region38: #{tpu_custom_call.1} parent=35 // pred_check_branch
          %1313 = sbr.rel (%p1311) target = $region40
        $region39: #{tpu_custom_call.1} parent=35 // pred_region
          %s1314 = smul.u32 16, %s23
          %s1316 = ssub.s32 2048, 2048
          %1317 = vsyncadd %s1307, %s1316
          %s1318 = smul.addr %s22, 32
          %s1319 = sadd.s32 %s1314, %s1318
          %s1320 = smul.addr %s1319, 128
          %s1321 = scalar_lea.hbm %s4, %s1320
          %s1322 = sshll.u32 %s1310, 4
          %s1323 = int_to_ptr.vmem [resolvable:$true] %s1322
          %1328 = dma.vmem_to_hbm [thread:$0]  %s1323, 2048, %s1321, %s1307, 128, 128, 8
        $region40: #{tpu_custom_call.1} parent=35 // pred_fallthru
          _
      $region36: #{tpu_custom_call.1} parent=5 // pred_fallthru
        _
      %p1329 = scmp.le.s32.totalorder 2, %s13
      // Predicated region
      $region41: #{tpu_custom_call.1} parent=5 // pred_check
        %p1330 = pneg %p1329
      $region42: #{tpu_custom_call.1} parent=5 // pred_check_branch
        %1332 = sbr.rel (%p1330) target = $region44
      $region43: #{tpu_custom_call.1} parent=5 // pred_region
        %s1333 = ssub.s32 %s13, 2
        // Predicated region
        $region45: #{tpu_custom_call.1} parent=43 // pred_check
          %p1334 = pneg %p158
        $region46: #{tpu_custom_call.1} parent=43 // pred_check_branch
          %1336 = sbr.rel (%p1334) target = $region48
        $region47: #{tpu_custom_call.1} parent=43 // pred_region
          %s1337 = sand.u32 %s143, 1
          %s1338 = scalar_lea.sflag [#allocation3], %s1337
          %s1339 = sand.u32 %s143, 1
          %s1340 = smul.addr %s1339, 128
          %s1341 = scalar_lea.vmem [#allocation2], %s1340
          %1342 = dma.done %s1338, 2048
        $region48: #{tpu_custom_call.1} parent=43 // pred_fallthru
          _
      $region44: #{tpu_custom_call.1} parent=5 // pred_fallthru
        _
    $region6: #{tpu_custom_call.1} parent=1 // loop_footer
      %s17 = sadd.s32 1, %s13
    $region7: #{tpu_custom_call.1} parent=1 // loop_footer_branch
      %12 = sbr.rel target = $region3
    $region8: #{tpu_custom_call.1} parent=1 // loop_exit
      _
    %1343 = vsyncpa [#allocation3], 1
    %s1344 = scalar_lea.sflag [#allocation3], 1
    %1345 = vsyncpa %s1344, 1

</llo_original>
